<compile_context>
chip_gen: v7x
topology: tpu7x:2x2x1
jax: 0.10.0
libtpu: 0.0.40
codegen_flags: <defaults>
</compile_context>

<pallas_src>
import jax
import jax.numpy as jnp
from jax.experimental import pallas as pl
from jax.experimental.pallas import tpu as pltpu


def bias_relu_kernel(x_ref, b_ref, o_ref):
    # x_ref, b_ref, o_ref: (B*C, H*W) blocks fully resident in VMEM.
    o_ref[...] = jnp.maximum(x_ref[...] + b_ref[...], 0.0)


def bias_layer_forward(x_nchw, bias_chw):
    """out = relu(x + bias), bias broadcast over batch.

    x_nchw:   (B, C, H, W) float32
    bias_chw: (C, H, W)    float32  (the learnable parameter of BiasLayer)
    """
    B, C, H, W = x_nchw.shape
    HW = H * W
    BC = B * C

    # Layout plumbing only (no compute hoisted into the wrapper): present a
    # lane-dense (B*C, HW) slab and replicate the (C, HW) bias B times so the
    # kernel is a pure elementwise add + ReLU on full vregs.
    x2 = x_nchw.reshape(BC, HW)
    b2 = jnp.tile(bias_chw.reshape(C, HW), (B, 1))  # (B*C, HW)

    # Whole problem (~8 KiB) fits trivially in VMEM on every generation
    # (16/32 MiB default scoped limits), so run it as a single grid step with
    # every operand resident in VMEM.
    # For non-toy sizes: tile rows as (TILE_R, HW) with TILE_R a multiple of
    # 8*C in the 256-1024 range, mark the row axis "parallel", and size the
    # double-buffered blocks against the per-chip VMEM budget
    # (16 MiB default scoped on v5e, 32 MiB on v6e, 64 MiB physical on v7x).
    out2 = pl.pallas_call(
        bias_relu_kernel,
        out_shape=jax.ShapeDtypeStruct((BC, HW), x2.dtype),
        in_specs=[
            pl.BlockSpec(memory_space=pltpu.MemorySpace.VMEM),
            pl.BlockSpec(memory_space=pltpu.MemorySpace.VMEM),
        ],
        out_specs=pl.BlockSpec(memory_space=pltpu.MemorySpace.VMEM),
    )(x2, b2)

    return out2.reshape(B, C, H, W)


if __name__ == "__main__":
    key = jax.random.PRNGKey(0)
    kx, kb = jax.random.split(key)

    B, C, H, W = 2, 4, 16, 16
    x = jax.random.normal(kx, (B, C, H, W), dtype=jnp.float32)
    # Deterministic "randn(shape) * 0.1" parameter init (shape = (C, H, W))
    bias = jax.random.normal(kb, (C, H, W), dtype=jnp.float32) * 0.1

    out = bias_layer_forward(x, bias)
    out = jax.block_until_ready(out)

    # sanity check against plain-JAX reference
    ref = jnp.maximum(x + bias[None], 0.0)
    assert out.shape == (B, C, H, W)
    assert jnp.allclose(out, ref, atol=1e-6), "mismatch vs reference"

    print("KERNEL_OK")
</pallas_src>

<mosaic_0001>
module attributes {stable_mosaic.version = 11 : i64} {
  func.func @bias_relu_kernel(%arg0: memref<8x256xf32, #tpu.memory_space<vmem>>, %arg1: memref<8x256xf32, #tpu.memory_space<vmem>>, %arg2: memref<8x256xf32, #tpu.memory_space<vmem>>) attributes {dimension_semantics = [], scalar_prefetch = 0 : i64, scratch_operands = 0 : i64, tpu.core_type = #tpu.core_type<tc>} {
    %c0 = arith.constant 0 : index
    %c0_0 = arith.constant 0 : index
    %0 = vector.load %arg0[%c0, %c0_0] : memref<8x256xf32, #tpu.memory_space<vmem>>, vector<8x256xf32>
    %c0_1 = arith.constant 0 : index
    %c0_2 = arith.constant 0 : index
    %1 = vector.load %arg1[%c0_1, %c0_2] : memref<8x256xf32, #tpu.memory_space<vmem>>, vector<8x256xf32>
    %2 = arith.addf %0, %1 : vector<8x256xf32>
    %cst = arith.constant 0.000000e+00 : f32
    %3 = vector.broadcast %cst : f32 to vector<8x256xf32>
    %4 = arith.maximumf %2, %3 : vector<8x256xf32>
    %c0_3 = arith.constant 0 : index
    %c0_4 = arith.constant 0 : index
    %5 = vector.load %arg2[%c0_3, %c0_4] : memref<8x256xf32, #tpu.memory_space<vmem>>, vector<8x256xf32>
    tpu.vector_store %arg2[%c0_3, %c0_4], %4 {strides = array<i32>} : memref<8x256xf32, #tpu.memory_space<vmem>>, vector<8x256xf32>,
    return
  }
}

</mosaic_0001>

<llo_original>
// kernel: tpu_custom_call.1
$region0: #{tpu_custom_call.1}
  #allocation0 [shape = 'u32[]', space=smem, size = 0x4, offset = 0x4, fixed_abs, tag = 'smem constant byte address 0x4 - core index']
  #allocation1 [shape = 'u32[144,128]{1,0:T(1,128)}', space=vmem, size = 0x12000, scoped, tag = 'internal scratch']
  %s0 = inlined_call_operand.hbm [shape: f32[8,256], index: 0, kind: input, shape index: {}]
  %s1 = inlined_call_operand.hbm [shape: f32[8,256], index: 1, kind: input, shape index: {}]
  %s2 = inlined_call_operand.hbm [shape: f32[8,256], index: 2, kind: output, shape index: {}]
  %s3 = sld [smem:[#allocation0]]
  $region26: #{tpu_custom_call.1} parent=0
    _
  %s5 = ssub.s32 1, %s3
  %s6 = scalar_select 0, %s5, %s3
  $region1: #{tpu_custom_call.1} parent=0
    #allocation2 [shape = 'u8[8192]{0}', space=vmem, size = 0x2000, scoped, tag = 'input window, operand 0, single buffered']
    #allocation3 [shape = 's32[1]{0}', space=sflag, size = 0x4, scoped, tag = 'scoped memory for tpu_custom_call.1']
    #allocation4 [shape = 's32[1]{0}', space=sflag, size = 0x4, scoped, tag = 'scoped memory for tpu_custom_call.1']
    #allocation5 [shape = 'u8[8192]{0}', space=vmem, size = 0x2000, scoped, tag = 'input window, operand 1, single buffered']
    #allocation6 [shape = 's32[1]{0}', space=sflag, size = 0x4, scoped, tag = 'scoped memory for tpu_custom_call.1']
    #allocation7 [shape = 'u8[8192]{0}', space=vmem, size = 0x2000, scoped, tag = 'output window, operand 0, single buffered']
    %7 = vsyncpa [#allocation3], 0
    %8 = vsyncpa [#allocation6], 0
    %9 = vsyncpa [#allocation4], 0
    // Predicated region
    $region2: #{tpu_custom_call.1} parent=1 // pred_check
      _
    $region3: #{tpu_custom_call.1} parent=1 // pred_check_branch
      %11 = sbr.rel (0) target = $region5
    $region4: #{tpu_custom_call.1} parent=1 // pred_region
      %s13 = ssub.s32 256, 256
      %14 = vsyncadd [#allocation3], %s13
      %s16 = sshll.u32 [#allocation2], 4
      %s17 = int_to_ptr.vmem [resolvable:$true] %s16
      %19 = dma.hbm_to_vmem [thread:$0]  %s0, 256, %s17, [#allocation3]
    $region5: #{tpu_custom_call.1} parent=1 // pred_fallthru
      _
    // Predicated region
    $region6: #{tpu_custom_call.1} parent=1 // pred_check
      _
    $region7: #{tpu_custom_call.1} parent=1 // pred_check_branch
      %21 = sbr.rel (0) target = $region9
    $region8: #{tpu_custom_call.1} parent=1 // pred_region
      %s23 = ssub.s32 256, 256
      %24 = vsyncadd [#allocation6], %s23
      %s26 = sshll.u32 [#allocation5], 4
      %s27 = int_to_ptr.vmem [resolvable:$true] %s26
      %29 = dma.hbm_to_vmem [thread:$0]  %s1, 256, %s27, [#allocation6]
    $region9: #{tpu_custom_call.1} parent=1 // pred_fallthru
      _
    // Predicated region
    $region10: #{tpu_custom_call.1} parent=1 // pred_check
      _
    $region11: #{tpu_custom_call.1} parent=1 // pred_check_branch
      %31 = sbr.rel (0) target = $region13
    $region12: #{tpu_custom_call.1} parent=1 // pred_region
      %32 = dma.done [#allocation3], 256
    $region13: #{tpu_custom_call.1} parent=1 // pred_fallthru
      _
    // Predicated region
    $region14: #{tpu_custom_call.1} parent=1 // pred_check
      _
    $region15: #{tpu_custom_call.1} parent=1 // pred_check_branch
      %34 = sbr.rel (0) target = $region17
    $region16: #{tpu_custom_call.1} parent=1 // pred_region
      %35 = dma.done [#allocation6], 256
    $region17: #{tpu_custom_call.1} parent=1 // pred_fallthru
      _
    %v36 = vld [vmem:[#allocation2] sm:$0xff]
    %v37 = vld [vmem:[#allocation2 + $0x8] sm:$0xff]
    %v38 = vld [vmem:[#allocation5] sm:$0xff]
    %v39 = vld [vmem:[#allocation5 + $0x8] sm:$0xff]
    %v40 = vadd.f32 %v36, %v38
    %v41 = vadd.f32 %v37, %v39
    %v42 = vmax.f32 %v40, 0.0
    %v43 = vmax.f32 %v41, 0.0
    %44 = vst [vmem:[#allocation7] sm:$0xff] %v42
    %45 = vst [vmem:[#allocation7 + $0x8] sm:$0xff] %v43
    // Predicated region
    $region18: #{tpu_custom_call.1} parent=1 // pred_check
      _
    $region19: #{tpu_custom_call.1} parent=1 // pred_check_branch
      %47 = sbr.rel (0) target = $region21
    $region20: #{tpu_custom_call.1} parent=1 // pred_region
      %s49 = ssub.s32 256, 256
      %50 = vsyncadd [#allocation4], %s49
      %s52 = sshll.u32 [#allocation7], 4
      %s53 = int_to_ptr.vmem [resolvable:$true] %s52
      %55 = dma.vmem_to_hbm [thread:$0]  %s53, 256, %s2, [#allocation4]
    $region21: #{tpu_custom_call.1} parent=1 // pred_fallthru
      _
    // Predicated region
    $region22: #{tpu_custom_call.1} parent=1 // pred_check
      _
    $region23: #{tpu_custom_call.1} parent=1 // pred_check_branch
      %57 = sbr.rel (0) target = $region25
    $region24: #{tpu_custom_call.1} parent=1 // pred_region
      %58 = dma.done [#allocation4], 256
    $region25: #{tpu_custom_call.1} parent=1 // pred_fallthru
      _
    %59 = vsyncpa [#allocation3], 1
    %60 = vsyncpa [#allocation6], 1
    %61 = vsyncpa [#allocation4], 1

</llo_original>
